<compile_context>
chip_gen: v7x
topology: tpu7x:2x2x1
jax: 0.10.0
libtpu: 0.0.40
codegen_flags: <defaults>
</compile_context>

<pallas_src>
import functools

import jax
import jax.numpy as jnp
from jax.experimental import pallas as pl
from jax.experimental.pallas import tpu as pltpu


def cond_prior_kernel(d_ref, c_ref, w_ref, out_ref, *, bias_row, tile_b):
    # d_ref   : (1,)  SMEM scalar-prefetch domain index (used only by index_maps).
    # c_ref   : (Bp,) SMEM scalar-prefetch class indices for the whole batch.
    # w_ref   : (C+1, 1, Lp) f32 VMEM weights of the selected domain;
    #           row `bias_row` (== C) is the fused bias row.
    # out_ref : (tile_b, Lp) f32 output tile = [means | log_vars | zero pad].
    del d_ref  # consumed by the index_maps only

    base = pl.program_id(0) * tile_b
    bias = w_ref[bias_row]                     # (1, Lp), hoisted once per tile

    # Unrolled row gather: out[j] = W[c[j]] + b  (vload + VPU add, no MXU).
    for j in range(tile_b):
        c = c_ref[base + j]                    # scalar read from SMEM
        out_ref[pl.ds(j, 1), :] = w_ref[c] + bias


def pack_params(w_means, b_means, w_logvar, b_logvar):
    """One-time layout plumbing (outside the kernel).

    Returns (num_domains, num_classes + 1, 1, Lp) float32 with Lp = 2L padded
    up to a multiple of 128 (lane-dense output stores):
      rows 0..C-1 : concat([W_means, W_logvar], out-dim) transposed to (C, 2L)
      row  C      : concat([b_means, b_logvar])  (fused bias row)
    The dummy size-1 axis keeps the class axis as an untiled leading dim so
    the kernel can dynamically index rows without sublane-slice gymnastics.
    """
    num_domains, latent, _ = w_means.shape
    two_l = 2 * latent
    lp = max(128, ((two_l + 127) // 128) * 128)

    w_cat = jnp.concatenate([w_means, w_logvar], axis=1)             # (D, 2L, C)
    w_t = jnp.transpose(w_cat, (0, 2, 1))                            # (D, C, 2L)
    b_cat = jnp.concatenate([b_means, b_logvar], axis=1)[:, None]    # (D, 1, 2L)
    packed = jnp.concatenate([w_t, b_cat], axis=1)                   # (D, C+1, 2L)
    packed = jnp.pad(packed, ((0, 0), (0, 0), (0, lp - two_l)))      # lane pad
    return packed[:, :, None, :].astype(jnp.float32)                 # (D, C+1, 1, Lp)


def cond_prior_forward(c_idx, d, w_packed, latent_size):
    """c_idx: (B,) int class labels; d: domain index; w_packed: (D, C+1, 1, Lp)."""
    batch = c_idx.shape[0]
    num_domains, cp1, _, lp = w_packed.shape
    num_classes = cp1 - 1

    tile_b = 8
    bp = ((batch + tile_b - 1) // tile_b) * tile_b

    # Wrapper-side validation: clamp class/domain so no OOB index reaches the
    # SMEM gather or the weight-block DMA. Padded rows use class 0 and are
    # sliced off below.
    c = jnp.clip(c_idx.astype(jnp.int32), 0, num_classes - 1)
    c = jnp.pad(c, (0, bp - batch))
    d_arr = jnp.clip(jnp.asarray([d], dtype=jnp.int32), 0, num_domains - 1)

    kernel = functools.partial(
        cond_prior_kernel, bias_row=num_classes, tile_b=tile_b)

    grid_spec = pltpu.PrefetchScalarGridSpec(
        num_scalar_prefetch=2,
        grid=(bp // tile_b,),
        in_specs=[
            # packed weights of the selected domain only (stays resident
            # across the batch grid axis; tiny vs. any generation's VMEM)
            pl.BlockSpec((pl.Squeezed(), cp1, 1, lp),
                         lambda i, d_ref, c_ref: (d_ref[0], 0, 0, 0)),
        ],
        out_specs=pl.BlockSpec((tile_b, lp), lambda i, d_ref, c_ref: (i, 0)),
    )

    out = pl.pallas_call(
        kernel,
        out_shape=jax.ShapeDtypeStruct((bp, lp), jnp.float32),
        grid_spec=grid_spec,
        compiler_params=pltpu.CompilerParams(
            dimension_semantics=("parallel",)),
    )(d_arr, c, w_packed)

    means = out[:batch, :latent_size]
    log_vars = out[:batch, latent_size:2 * latent_size]
    return means, log_vars


def init_params(key, num_domains, num_classes, latent_size):
    """Deterministic nn.Linear-style init: U(-1/sqrt(in), 1/sqrt(in))."""
    bound = 1.0 / jnp.sqrt(jnp.float32(num_classes))
    k1, k2, k3, k4 = jax.random.split(key, 4)
    w_means = jax.random.uniform(
        k1, (num_domains, latent_size, num_classes), jnp.float32, -bound, bound)
    b_means = jax.random.uniform(
        k2, (num_domains, latent_size), jnp.float32, -bound, bound)
    w_logvar = jax.random.uniform(
        k3, (num_domains, latent_size, num_classes), jnp.float32, -bound, bound)
    b_logvar = jax.random.uniform(
        k4, (num_domains, latent_size), jnp.float32, -bound, bound)
    return w_means, b_means, w_logvar, b_logvar


if __name__ == "__main__":
    num_classes = 16
    num_domains = 3
    latent_size = 32
    batch = 8
    domain = 1

    key = jax.random.PRNGKey(0)
    kp, kc = jax.random.split(key)
    w_means, b_means, w_logvar, b_logvar = init_params(
        kp, num_domains, num_classes, latent_size)

    c_idx = jax.random.randint(kc, (batch,), 0, num_classes, dtype=jnp.int32)

    w_packed = pack_params(w_means, b_means, w_logvar, b_logvar)

    means, log_vars = cond_prior_forward(c_idx, domain, w_packed, latent_size)
    means = jax.block_until_ready(means)
    log_vars = jax.block_until_ready(log_vars)

    # Pure-JAX reference check of the forward semantics.
    onehot_ref = jax.nn.one_hot(c_idx, num_classes, dtype=jnp.float32)
    means_ref = onehot_ref @ w_means[domain].T + b_means[domain]
    logvar_ref = onehot_ref @ w_logvar[domain].T + b_logvar[domain]
    assert jnp.allclose(means, means_ref, atol=1e-5)
    assert jnp.allclose(log_vars, logvar_ref, atol=1e-5)

    print("KERNEL_OK")
</pallas_src>

<mosaic_0001>
module attributes {stable_mosaic.version = 11 : i64} {
  func.func @cond_prior_kernel(%arg0: i32, %arg1: memref<1xi32, #tpu.memory_space<smem>>, %arg2: memref<8xi32, #tpu.memory_space<smem>>, %arg3: memref<1x17x1x128xf32, #tpu.memory_space<vmem>>, %arg4: memref<8x128xf32, #tpu.memory_space<vmem>>) attributes {dimension_semantics = [#tpu.dimension_semantics<parallel>], iteration_bounds = array<i64: 1>, scalar_prefetch = 2 : i64, scratch_operands = 0 : i64, tpu.core_type = #tpu.core_type<tc>, window_params = [{transform_indices = @transform_0, window_bounds = array<i64: 1, 17, 1, 128>}, {transform_indices = @transform_1, window_bounds = array<i64: 8, 128>}]} {
    %c8_i32 = arith.constant 8 : i32
    %0 = arith.muli %arg0, %c8_i32 : i32
    %c0 = arith.constant 0 : index
    %c16 = arith.constant 16 : index
    %c0_0 = arith.constant 0 : index
    %c0_1 = arith.constant 0 : index
    %1 = vector.load %arg3[%c0, %c16, %c0_0, %c0_1] : memref<1x17x1x128xf32, #tpu.memory_space<vmem>>, vector<1x1x1x128xf32>
    %2 = vector.shape_cast %1 : vector<1x1x1x128xf32> to vector<1x128xf32>
    %c0_i32 = arith.constant 0 : i32
    %3 = arith.addi %0, %c0_i32 : i32
    %4 = arith.index_cast %3 : i32 to index
    %5 = memref.load %arg2[%4] : memref<8xi32, #tpu.memory_space<smem>>
    %c0_2 = arith.constant 0 : index
    %6 = arith.index_cast %5 : i32 to index
    %c0_3 = arith.constant 0 : index
    %c0_4 = arith.constant 0 : index
    %7 = vector.load %arg3[%c0_2, %6, %c0_3, %c0_4] : memref<1x17x1x128xf32, #tpu.memory_space<vmem>>, vector<1x1x1x128xf32>
    %8 = vector.shape_cast %7 : vector<1x1x1x128xf32> to vector<1x128xf32>
    %9 = arith.addf %8, %2 : vector<1x128xf32>
    %c0_5 = arith.constant 0 : index
    %c0_6 = arith.constant 0 : index
    %10 = vector.load %arg4[%c0_5, %c0_6] : memref<8x128xf32, #tpu.memory_space<vmem>>, vector<1x128xf32>
    tpu.vector_store %arg4[%c0_5, %c0_6], %9 {strides = array<i32>} : memref<8x128xf32, #tpu.memory_space<vmem>>, vector<1x128xf32>,
    %c1_i32 = arith.constant 1 : i32
    %11 = arith.addi %0, %c1_i32 : i32
    %12 = arith.index_cast %11 : i32 to index
    %13 = memref.load %arg2[%12] : memref<8xi32, #tpu.memory_space<smem>>
    %c0_7 = arith.constant 0 : index
    %14 = arith.index_cast %13 : i32 to index
    %c0_8 = arith.constant 0 : index
    %c0_9 = arith.constant 0 : index
    %15 = vector.load %arg3[%c0_7, %14, %c0_8, %c0_9] : memref<1x17x1x128xf32, #tpu.memory_space<vmem>>, vector<1x1x1x128xf32>
    %16 = vector.shape_cast %15 : vector<1x1x1x128xf32> to vector<1x128xf32>
    %17 = arith.addf %16, %2 : vector<1x128xf32>
    %c1 = arith.constant 1 : index
    %c0_10 = arith.constant 0 : index
    %18 = vector.load %arg4[%c1, %c0_10] : memref<8x128xf32, #tpu.memory_space<vmem>>, vector<1x128xf32>
    tpu.vector_store %arg4[%c1, %c0_10], %17 {strides = array<i32>} : memref<8x128xf32, #tpu.memory_space<vmem>>, vector<1x128xf32>,
    %c2_i32 = arith.constant 2 : i32
    %19 = arith.addi %0, %c2_i32 : i32
    %20 = arith.index_cast %19 : i32 to index
    %21 = memref.load %arg2[%20] : memref<8xi32, #tpu.memory_space<smem>>
    %c0_11 = arith.constant 0 : index
    %22 = arith.index_cast %21 : i32 to index
    %c0_12 = arith.constant 0 : index
    %c0_13 = arith.constant 0 : index
    %23 = vector.load %arg3[%c0_11, %22, %c0_12, %c0_13] : memref<1x17x1x128xf32, #tpu.memory_space<vmem>>, vector<1x1x1x128xf32>
    %24 = vector.shape_cast %23 : vector<1x1x1x128xf32> to vector<1x128xf32>
    %25 = arith.addf %24, %2 : vector<1x128xf32>
    %c2 = arith.constant 2 : index
    %c0_14 = arith.constant 0 : index
    %26 = vector.load %arg4[%c2, %c0_14] : memref<8x128xf32, #tpu.memory_space<vmem>>, vector<1x128xf32>
    tpu.vector_store %arg4[%c2, %c0_14], %25 {strides = array<i32>} : memref<8x128xf32, #tpu.memory_space<vmem>>, vector<1x128xf32>,
    %c3_i32 = arith.constant 3 : i32
    %27 = arith.addi %0, %c3_i32 : i32
    %28 = arith.index_cast %27 : i32 to index
    %29 = memref.load %arg2[%28] : memref<8xi32, #tpu.memory_space<smem>>
    %c0_15 = arith.constant 0 : index
    %30 = arith.index_cast %29 : i32 to index
    %c0_16 = arith.constant 0 : index
    %c0_17 = arith.constant 0 : index
    %31 = vector.load %arg3[%c0_15, %30, %c0_16, %c0_17] : memref<1x17x1x128xf32, #tpu.memory_space<vmem>>, vector<1x1x1x128xf32>
    %32 = vector.shape_cast %31 : vector<1x1x1x128xf32> to vector<1x128xf32>
    %33 = arith.addf %32, %2 : vector<1x128xf32>
    %c3 = arith.constant 3 : index
    %c0_18 = arith.constant 0 : index
    %34 = vector.load %arg4[%c3, %c0_18] : memref<8x128xf32, #tpu.memory_space<vmem>>, vector<1x128xf32>
    tpu.vector_store %arg4[%c3, %c0_18], %33 {strides = array<i32>} : memref<8x128xf32, #tpu.memory_space<vmem>>, vector<1x128xf32>,
    %c4_i32 = arith.constant 4 : i32
    %35 = arith.addi %0, %c4_i32 : i32
    %36 = arith.index_cast %35 : i32 to index
    %37 = memref.load %arg2[%36] : memref<8xi32, #tpu.memory_space<smem>>
    %c0_19 = arith.constant 0 : index
    %38 = arith.index_cast %37 : i32 to index
    %c0_20 = arith.constant 0 : index
    %c0_21 = arith.constant 0 : index
    %39 = vector.load %arg3[%c0_19, %38, %c0_20, %c0_21] : memref<1x17x1x128xf32, #tpu.memory_space<vmem>>, vector<1x1x1x128xf32>
    %40 = vector.shape_cast %39 : vector<1x1x1x128xf32> to vector<1x128xf32>
    %41 = arith.addf %40, %2 : vector<1x128xf32>
    %c4 = arith.constant 4 : index
    %c0_22 = arith.constant 0 : index
    %42 = vector.load %arg4[%c4, %c0_22] : memref<8x128xf32, #tpu.memory_space<vmem>>, vector<1x128xf32>
    tpu.vector_store %arg4[%c4, %c0_22], %41 {strides = array<i32>} : memref<8x128xf32, #tpu.memory_space<vmem>>, vector<1x128xf32>,
    %c5_i32 = arith.constant 5 : i32
    %43 = arith.addi %0, %c5_i32 : i32
    %44 = arith.index_cast %43 : i32 to index
    %45 = memref.load %arg2[%44] : memref<8xi32, #tpu.memory_space<smem>>
    %c0_23 = arith.constant 0 : index
    %46 = arith.index_cast %45 : i32 to index
    %c0_24 = arith.constant 0 : index
    %c0_25 = arith.constant 0 : index
    %47 = vector.load %arg3[%c0_23, %46, %c0_24, %c0_25] : memref<1x17x1x128xf32, #tpu.memory_space<vmem>>, vector<1x1x1x128xf32>
    %48 = vector.shape_cast %47 : vector<1x1x1x128xf32> to vector<1x128xf32>
    %49 = arith.addf %48, %2 : vector<1x128xf32>
    %c5 = arith.constant 5 : index
    %c0_26 = arith.constant 0 : index
    %50 = vector.load %arg4[%c5, %c0_26] : memref<8x128xf32, #tpu.memory_space<vmem>>, vector<1x128xf32>
    tpu.vector_store %arg4[%c5, %c0_26], %49 {strides = array<i32>} : memref<8x128xf32, #tpu.memory_space<vmem>>, vector<1x128xf32>,
    %c6_i32 = arith.constant 6 : i32
    %51 = arith.addi %0, %c6_i32 : i32
    %52 = arith.index_cast %51 : i32 to index
    %53 = memref.load %arg2[%52] : memref<8xi32, #tpu.memory_space<smem>>
    %c0_27 = arith.constant 0 : index
    %54 = arith.index_cast %53 : i32 to index
    %c0_28 = arith.constant 0 : index
    %c0_29 = arith.constant 0 : index
    %55 = vector.load %arg3[%c0_27, %54, %c0_28, %c0_29] : memref<1x17x1x128xf32, #tpu.memory_space<vmem>>, vector<1x1x1x128xf32>
    %56 = vector.shape_cast %55 : vector<1x1x1x128xf32> to vector<1x128xf32>
    %57 = arith.addf %56, %2 : vector<1x128xf32>
    %c6 = arith.constant 6 : index
    %c0_30 = arith.constant 0 : index
    %58 = vector.load %arg4[%c6, %c0_30] : memref<8x128xf32, #tpu.memory_space<vmem>>, vector<1x128xf32>
    tpu.vector_store %arg4[%c6, %c0_30], %57 {strides = array<i32>} : memref<8x128xf32, #tpu.memory_space<vmem>>, vector<1x128xf32>,
    %c7_i32 = arith.constant 7 : i32
    %59 = arith.addi %0, %c7_i32 : i32
    %60 = arith.index_cast %59 : i32 to index
    %61 = memref.load %arg2[%60] : memref<8xi32, #tpu.memory_space<smem>>
    %c0_31 = arith.constant 0 : index
    %62 = arith.index_cast %61 : i32 to index
    %c0_32 = arith.constant 0 : index
    %c0_33 = arith.constant 0 : index
    %63 = vector.load %arg3[%c0_31, %62, %c0_32, %c0_33] : memref<1x17x1x128xf32, #tpu.memory_space<vmem>>, vector<1x1x1x128xf32>
    %64 = vector.shape_cast %63 : vector<1x1x1x128xf32> to vector<1x128xf32>
    %65 = arith.addf %64, %2 : vector<1x128xf32>
    %c7 = arith.constant 7 : index
    %c0_34 = arith.constant 0 : index
    %66 = vector.load %arg4[%c7, %c0_34] : memref<8x128xf32, #tpu.memory_space<vmem>>, vector<1x128xf32>
    tpu.vector_store %arg4[%c7, %c0_34], %65 {strides = array<i32>} : memref<8x128xf32, #tpu.memory_space<vmem>>, vector<1x128xf32>,
    return
  }
  func.func @transform_0(%arg0: i32, %arg1: memref<1xi32, #tpu.memory_space<smem>>, %arg2: memref<8xi32, #tpu.memory_space<smem>>) -> (i32, i32, i32, i32) {
    %c0 = arith.constant 0 : index
    %0 = memref.load %arg1[%c0] : memref<1xi32, #tpu.memory_space<smem>>
    %c0_i32 = arith.constant 0 : i32
    %c0_i32_0 = arith.constant 0 : i32
    %c0_i32_1 = arith.constant 0 : i32
    %c0_i32_2 = arith.constant 0 : i32
    return %0, %c0_i32, %c0_i32_0, %c0_i32_1 : i32, i32, i32, i32
  }
  func.func @transform_1(%arg0: i32, %arg1: memref<1xi32, #tpu.memory_space<smem>>, %arg2: memref<8xi32, #tpu.memory_space<smem>>) -> (i32, i32) {
    %c0_i32 = arith.constant 0 : i32
    %c0_i32_0 = arith.constant 0 : i32
    return %arg0, %c0_i32 : i32, i32
  }
}

</mosaic_0001>

<llo_original>
// kernel: tpu_custom_call.1
$region0: #{tpu_custom_call.1}
  #allocation0 [shape = 'u32[]', space=smem, size = 0x4, offset = 0x4, fixed_abs, tag = 'smem constant byte address 0x4 - core index']
  #allocation1 [shape = 'u32[144,128]{1,0:T(1,128)}', space=vmem, size = 0x12000, scoped, tag = 'internal scratch']
  #allocation2 [shape = 's32[1]{0}', space=sflag, size = 0x4, scoped, tag = 'scoped memory for tpu_custom_call.1']
  #allocation3 [shape = 's32[1]{0:T(128)S(6)}', space=smem, size = 0x200, scoped, tag = 'prefetched SMEM operand 0']
  #allocation4 [shape = 'u8[512]{0}', space=smem, size = 0x200, scoped, tag = 'prefetched SMEM operand 1']
  %s0 = inlined_call_operand.<no memory space> [shape: s32[1], index: 0, kind: input, shape index: {}]
  %s1 = inlined_call_operand.vmem [shape: s32[8], index: 1, kind: input, shape index: {}]
  %s2 = inlined_call_operand.hbm [shape: f32[3,17,1,128], index: 2, kind: input, shape index: {}]
  %s3 = inlined_call_operand.hbm [shape: f32[8,128], index: 3, kind: output, shape index: {}]
  %s4 = sld [smem:[#allocation0]]
  $region18: #{tpu_custom_call.1} parent=0
    _
  %s6 = ssub.s32 1, %s4
  %s7 = scalar_select 0, %s6, %s4
  %8 = sst [smem:[#allocation3]] %s0
  %s9 = sshll.u32 %s1, 4
  %s10 = int_to_ptr.vmem [resolvable:$true] %s9
  %12 = dma.vmem_to_smem %s10, 16, [#allocation4], [#allocation2]
  %13 = dma.done [#allocation2], 16
  %14 = sfence
  $region1: #{tpu_custom_call.1} parent=0
    #allocation5 [shape = 'u8[8704]{0}', space=vmem, size = 0x2400, scoped, tag = 'input window, operand 2, single buffered']
    #allocation6 [shape = 's32[1]{0}', space=sflag, size = 0x4, scoped, tag = 'scoped memory for tpu_custom_call.1']
    #allocation7 [shape = 's32[1]{0}', space=sflag, size = 0x4, scoped, tag = 'scoped memory for tpu_custom_call.1']
    #allocation8 [shape = 'u8[4096]{0}', space=vmem, size = 0x1000, scoped, tag = 'output window, operand 0, single buffered']
    %15 = vsyncpa [#allocation6], 0
    %16 = vsyncpa [#allocation7], 0
    // Predicated region
    $region2: #{tpu_custom_call.1} parent=1 // pred_check
      _
    $region3: #{tpu_custom_call.1} parent=1 // pred_check_branch
      %18 = sbr.rel (0) target = $region5
    $region4: #{tpu_custom_call.1} parent=1 // pred_region
      %s19 = sld [smem:[#allocation3]]
      %s21 = ssub.s32 272, 272
      %22 = vsyncadd [#allocation6], %s21
      %s23 = smul.addr %s19, 17
      %s24 = smul.addr %s23, 16
      %s25 = scalar_lea.hbm %s2, %s24
      %s26 = sshll.u32 [#allocation5], 4
      %s27 = int_to_ptr.vmem [resolvable:$true] %s26
      %32 = dma.hbm_to_vmem [thread:$0]  %s25, 272, %s27, [#allocation6], 16, 16, 1
    $region5: #{tpu_custom_call.1} parent=1 // pred_fallthru
      _
    // Predicated region
    $region6: #{tpu_custom_call.1} parent=1 // pred_check
      _
    $region7: #{tpu_custom_call.1} parent=1 // pred_check_branch
      %34 = sbr.rel (0) target = $region9
    $region8: #{tpu_custom_call.1} parent=1 // pred_region
      %35 = dma.done [#allocation6], 272
    $region9: #{tpu_custom_call.1} parent=1 // pred_fallthru
      _
    %s36 = sld [smem:[#allocation3]]
    %s37 = smul.u32 0, 8
    %s38 = scalar_lea.vmem [#allocation5], 16
    %v39 = vld [vmem:[%s38] sm:$0x1]
    %s40 = sld [smem:[#allocation4 + %s37]]
    %s41 = scalar_lea.vmem [#allocation5], %s40
    %v42 = vld [vmem:[%s41] sm:$0x1]
    %v43 = vadd.f32 %v42, %v39
    %44 = vst [vmem:[#allocation8] sm:$0x1] %v43
    %s45 = sadd.s32 %s37, 1
    %s46 = sld [smem:[#allocation4 + %s45]]
    %s47 = scalar_lea.vmem [#allocation5], %s46
    %v48 = vld [vmem:[%s47] sm:$0x1]
    %v49 = vadd.f32 %v48, %v39
    %50 = vst [vmem:[#allocation8 + $0x1] sm:$0x1] %v49
    %s51 = sadd.s32 %s37, 2
    %s52 = sld [smem:[#allocation4 + %s51]]
    %s53 = scalar_lea.vmem [#allocation5], %s52
    %v54 = vld [vmem:[%s53] sm:$0x1]
    %v55 = vadd.f32 %v54, %v39
    %56 = vst [vmem:[#allocation8 + $0x2] sm:$0x1] %v55
    %s57 = sadd.s32 %s37, 3
    %s58 = sld [smem:[#allocation4 + %s57]]
    %s59 = scalar_lea.vmem [#allocation5], %s58
    %v60 = vld [vmem:[%s59] sm:$0x1]
    %v61 = vadd.f32 %v60, %v39
    %62 = vst [vmem:[#allocation8 + $0x3] sm:$0x1] %v61
    %s63 = sadd.s32 %s37, 4
    %s64 = sld [smem:[#allocation4 + %s63]]
    %s65 = scalar_lea.vmem [#allocation5], %s64
    %v66 = vld [vmem:[%s65] sm:$0x1]
    %v67 = vadd.f32 %v66, %v39
    %68 = vst [vmem:[#allocation8 + $0x4] sm:$0x1] %v67
    %s69 = sadd.s32 %s37, 5
    %s70 = sld [smem:[#allocation4 + %s69]]
    %s71 = scalar_lea.vmem [#allocation5], %s70
    %v72 = vld [vmem:[%s71] sm:$0x1]
    %v73 = vadd.f32 %v72, %v39
    %74 = vst [vmem:[#allocation8 + $0x5] sm:$0x1] %v73
    %s75 = sadd.s32 %s37, 6
    %s76 = sld [smem:[#allocation4 + %s75]]
    %s77 = scalar_lea.vmem [#allocation5], %s76
    %v78 = vld [vmem:[%s77] sm:$0x1]
    %v79 = vadd.f32 %v78, %v39
    %80 = vst [vmem:[#allocation8 + $0x6] sm:$0x1] %v79
    %s81 = sadd.s32 %s37, 7
    %s82 = sld [smem:[#allocation4 + %s81]]
    %s83 = scalar_lea.vmem [#allocation5], %s82
    %v84 = vld [vmem:[%s83] sm:$0x1]
    %v85 = vadd.f32 %v84, %v39
    %86 = vst [vmem:[#allocation8 + $0x7] sm:$0x1] %v85
    // Predicated region
    $region10: #{tpu_custom_call.1} parent=1 // pred_check
      _
    $region11: #{tpu_custom_call.1} parent=1 // pred_check_branch
      %88 = sbr.rel (0) target = $region13
    $region12: #{tpu_custom_call.1} parent=1 // pred_region
      %s90 = ssub.s32 128, 128
      %91 = vsyncadd [#allocation7], %s90
      %s93 = sshll.u32 [#allocation8], 4
      %s94 = int_to_ptr.vmem [resolvable:$true] %s93
      %96 = dma.vmem_to_hbm [thread:$0]  %s94, 128, %s3, [#allocation7]
    $region13: #{tpu_custom_call.1} parent=1 // pred_fallthru
      _
    // Predicated region
    $region14: #{tpu_custom_call.1} parent=1 // pred_check
      _
    $region15: #{tpu_custom_call.1} parent=1 // pred_check_branch
      %98 = sbr.rel (0) target = $region17
    $region16: #{tpu_custom_call.1} parent=1 // pred_region
      %99 = dma.done [#allocation7], 128
    $region17: #{tpu_custom_call.1} parent=1 // pred_fallthru
      _
    %100 = vsyncpa [#allocation6], 1
    %101 = vsyncpa [#allocation7], 1

</llo_original>
